<compile_context>
chip_gen: v5e
topology: v5e:2x2
jax: 0.10.0
libtpu: 0.0.40
codegen_flags: <defaults>
</compile_context>

<pallas_src>
import jax
import jax.numpy as jnp
from jax.experimental import pallas as pl
from jax.experimental.pallas import tpu as pltpu

_BN_EPS = 1e-5


def _ffnn_kernel(x_ref, w1_ref, b1_ref, w2_ref, b2_ref, w3_ref, b3_ref,
                 w4_ref, b4_ref, out_ref):
    # x is bf16 and goes straight to the MXU (native bf16 on v5e/v6e/v7x, f32 acc).
    h = x_ref[...]

    # BatchNorm(eval) is pre-folded into (w1, b1) on the host.
    # Bias-add + ReLU in f32 (v5e-safe), then re-pack to bf16 for the next MXU pass.
    h = jnp.maximum(
        jnp.dot(h, w1_ref[...], preferred_element_type=jnp.float32) + b1_ref[...],
        0.0).astype(jnp.bfloat16)
    h = jnp.maximum(
        jnp.dot(h, w2_ref[...], preferred_element_type=jnp.float32) + b2_ref[...],
        0.0).astype(jnp.bfloat16)
    h = jnp.maximum(
        jnp.dot(h, w3_ref[...], preferred_element_type=jnp.float32) + b3_ref[...],
        0.0).astype(jnp.bfloat16)
    logits = jnp.dot(h, w4_ref[...], preferred_element_type=jnp.float32) + b4_ref[...]

    # Numerically stable softmax over the (8-lane padded) class axis; padded lanes
    # carry a -1e30 bias so exp() is exactly 0 there and the result equals
    # softmax(dim=1).  Exact f32 divide so rows sum to 1 (to rounding).
    m = jnp.max(logits, axis=1, keepdims=True)
    e = jnp.exp(logits - m)
    denom = jnp.sum(e, axis=1, keepdims=True)
    out_ref[...] = (e / denom).astype(out_ref.dtype)


def _round_up(n, m):
    return ((n + m - 1) // m) * m


def _cdiv(a, b):
    return -(-a // b)


def _choose_tiling(batch, tile_b_req):
    """Pick (tile_b, num_tiles): padding waste <8 rows per tile, and >=2 tiles for
    large batches so v7x's two TensorCores both get work (harmless on v5e/v6e)."""
    tile_b_req = max(8, _round_up(tile_b_req, 8))
    num_tiles = _cdiv(batch, tile_b_req)
    if num_tiles == 1 and batch > 1024:
        num_tiles = 2
    tile_b = _round_up(_cdiv(batch, num_tiles), 8)
    num_tiles = _cdiv(batch, tile_b)
    return tile_b, num_tiles


def _fold_and_pad_params(params, out_pad):
    """Fold eval-mode BatchNorm into linear-1, pad linear-4 to out_pad lanes, and
    cast weights to bf16 for the MXU (biases stay f32: the add lands on the f32
    accumulator, so no bf16 VPU math is introduced)."""
    scale = params["gamma"] * jax.lax.rsqrt(params["running_var"] + _BN_EPS)  # [1, D]
    shift = params["beta"] - params["running_mean"] * scale                   # [1, D]
    w1f = scale.reshape(-1, 1) * params["w1"]                                 # [D, H1]
    b1f = (shift @ params["w1"] + params["b1"]).astype(jnp.float32)           # [1, H1]

    h3, out_dim = params["w4"].shape
    w4p = jnp.zeros((h3, out_pad), jnp.float32).at[:, :out_dim].set(params["w4"])
    # -1e30 pad bias stays in f32 (never cast to bf16).
    b4p = jnp.full((1, out_pad), -1e30, jnp.float32).at[:, :out_dim].set(params["b4"])

    bf = jnp.bfloat16
    return (w1f.astype(bf), b1f,
            params["w2"].astype(bf), params["b2"].astype(jnp.float32),
            params["w3"].astype(bf), params["b3"].astype(jnp.float32),
            w4p.astype(bf), b4p)


def feed_forward_nn(x, params, *, tile_b=4096):
    """x: [B, input_dim] float32.  params: dict produced by init_params()."""
    B, D = x.shape
    output_dim = params["w4"].shape[1]
    out_pad = _round_up(max(output_dim, 1), 8)
    weights = _fold_and_pad_params(params, out_pad)

    tile_b, num_tiles = _choose_tiling(B, tile_b)
    b_pad = tile_b * num_tiles
    if b_pad != B:
        x = jnp.pad(x, ((0, b_pad - B), (0, 0)))
    x = x.astype(jnp.bfloat16)  # halve HBM traffic on the dominant input stream

    def _batch_map(i):
        return (i, 0)

    def _const_map(i):
        return (0, 0)

    in_specs = [pl.BlockSpec((tile_b, D), _batch_map)]
    in_specs += [pl.BlockSpec(w.shape, _const_map) for w in weights]
    out_spec = pl.BlockSpec((tile_b, out_pad), _batch_map)

    dims = [D] + [w.shape[1] for w in weights[0::2]]          # [D, H1, H2, H3, out_pad]
    flops = 2 * b_pad * sum(a * b for a, b in zip(dims[:-1], dims[1:]))
    bytes_accessed = (b_pad * D * 2                            # bf16 x stream
                      + b_pad * out_pad * 4                    # f32 softmax output
                      + sum(int(w.size) * w.dtype.itemsize for w in weights))
    cost = pl.CostEstimate(flops=flops,
                           transcendentals=b_pad * out_pad,    # exp per logit lane
                           bytes_accessed=int(bytes_accessed))

    out = pl.pallas_call(
        _ffnn_kernel,
        out_shape=jax.ShapeDtypeStruct((b_pad, out_pad), jnp.float32),
        grid=(num_tiles,),
        in_specs=in_specs,
        out_specs=out_spec,
        compiler_params=pltpu.CompilerParams(
            dimension_semantics=("parallel",),     # megacore sharding on v7x
            vmem_limit_bytes=48 * 1024 * 1024,     # headroom; <= v7x's 64 MiB physical
        ),
        cost_estimate=cost,
    )(x, *weights)

    return out[:B, :output_dim]


def init_params(key, input_dim, output_dim=2, layers=(20, 10, 5)):
    """Deterministic synthetic parameters matching FeedForwardNN's shapes."""
    dims = [input_dim] + list(layers) + [output_dim]
    keys = jax.random.split(key, 2 * (len(dims) - 1) + 4)
    p = {}
    # BatchNorm1d params (non-trivial values so the folded path is exercised).
    p["gamma"] = (1.0 + 0.1 * jax.random.normal(keys[0], (1, input_dim))).astype(jnp.float32)
    p["beta"] = (0.1 * jax.random.normal(keys[1], (1, input_dim))).astype(jnp.float32)
    p["running_mean"] = (0.05 * jax.random.normal(keys[2], (1, input_dim))).astype(jnp.float32)
    p["running_var"] = (1.0 + 0.1 * jax.random.uniform(keys[3], (1, input_dim))).astype(jnp.float32)
    # Linear layers, stored as [in, out] (PyTorch stores [out, in]; forward is x @ W.T).
    for i in range(len(dims) - 1):
        fan_in, fan_out = dims[i], dims[i + 1]
        scale = 1.0 / jnp.sqrt(jnp.float32(fan_in))
        kw, kb = keys[4 + 2 * i], keys[5 + 2 * i]
        p[f"w{i+1}"] = (scale * jax.random.uniform(kw, (fan_in, fan_out), minval=-1.0, maxval=1.0)).astype(jnp.float32)
        p[f"b{i+1}"] = (scale * jax.random.uniform(kb, (1, fan_out), minval=-1.0, maxval=1.0)).astype(jnp.float32)
    return p


def _reference(x, p):
    """Pure-JAX f32 reference of the original (un-folded) eval-mode forward pass."""
    h = (x - p["running_mean"]) / jnp.sqrt(p["running_var"] + _BN_EPS) * p["gamma"] + p["beta"]
    for i in range(1, 4):
        h = jnp.maximum(h @ p[f"w{i}"] + p[f"b{i}"], 0.0)
    logits = h @ p["w4"] + p["b4"]
    return jax.nn.softmax(logits, axis=1)


if __name__ == "__main__":
    key = jax.random.PRNGKey(0)
    k_x, k_p = jax.random.split(key)

    batch, input_dim = 50, 16     # non-multiple of tile_b to exercise batch padding
    x = jax.random.normal(k_x, (batch, input_dim), dtype=jnp.float32)
    params = init_params(k_p, input_dim, output_dim=2, layers=(20, 10, 5))

    out = feed_forward_nn(x, params, tile_b=16)   # 4 batch tiles (padded 50 -> 64)
    out = jax.block_until_ready(out)
    ref = _reference(x, params)

    assert out.shape == (batch, 2)
    # bf16 x/weights/intermediates on the MXU path -> ~1e-3-level differences vs the
    # pure-f32 reference; softmax uses an exact f32 divide so rows sum to 1.
    assert jnp.allclose(out, ref, atol=1e-2, rtol=1e-2)
    assert jnp.allclose(jnp.sum(out, axis=1), 1.0, atol=1e-3)

    print("KERNEL_OK")
</pallas_src>

<mosaic_0001>
module attributes {stable_mosaic.version = 11 : i64} {
  func.func @_ffnn_kernel(%arg0: i32, %arg1: memref<16x16xbf16, #tpu.memory_space<vmem>>, %arg2: memref<16x20xbf16, #tpu.memory_space<vmem>>, %arg3: memref<1x20xf32, #tpu.memory_space<vmem>>, %arg4: memref<20x10xbf16, #tpu.memory_space<vmem>>, %arg5: memref<1x10xf32, #tpu.memory_space<vmem>>, %arg6: memref<10x5xbf16, #tpu.memory_space<vmem>>, %arg7: memref<1x5xf32, #tpu.memory_space<vmem>>, %arg8: memref<5x8xbf16, #tpu.memory_space<vmem>>, %arg9: memref<1x8xf32, #tpu.memory_space<vmem>>, %arg10: memref<16x8xf32, #tpu.memory_space<vmem>>) attributes {dimension_semantics = [#tpu.dimension_semantics<parallel>], iteration_bounds = array<i64: 4>, scalar_prefetch = 0 : i64, scratch_operands = 0 : i64, tpu.core_type = #tpu.core_type<tc>, window_params = [{transform_indices = @transform_0, window_bounds = array<i64: 16, 16>}, {pipeline_mode = #tpu.pipeline_mode<synchronous>, transform_indices = @transform_1, window_bounds = array<i64: 16, 20>}, {pipeline_mode = #tpu.pipeline_mode<synchronous>, transform_indices = @transform_2, window_bounds = array<i64: 1, 20>}, {pipeline_mode = #tpu.pipeline_mode<synchronous>, transform_indices = @transform_3, window_bounds = array<i64: 20, 10>}, {pipeline_mode = #tpu.pipeline_mode<synchronous>, transform_indices = @transform_4, window_bounds = array<i64: 1, 10>}, {pipeline_mode = #tpu.pipeline_mode<synchronous>, transform_indices = @transform_5, window_bounds = array<i64: 10, 5>}, {pipeline_mode = #tpu.pipeline_mode<synchronous>, transform_indices = @transform_6, window_bounds = array<i64: 1, 5>}, {pipeline_mode = #tpu.pipeline_mode<synchronous>, transform_indices = @transform_7, window_bounds = array<i64: 5, 8>}, {pipeline_mode = #tpu.pipeline_mode<synchronous>, transform_indices = @transform_8, window_bounds = array<i64: 1, 8>}, {transform_indices = @transform_9, window_bounds = array<i64: 16, 8>}]} {
    %c0 = arith.constant 0 : index
    %c0_0 = arith.constant 0 : index
    %0 = vector.load %arg1[%c0, %c0_0] : memref<16x16xbf16, #tpu.memory_space<vmem>>, vector<16x16xbf16>
    %c0_1 = arith.constant 0 : index
    %c0_2 = arith.constant 0 : index
    %1 = vector.load %arg2[%c0_1, %c0_2] : memref<16x20xbf16, #tpu.memory_space<vmem>>, vector<16x20xbf16>
    %cst = arith.constant dense<0.000000e+00> : vector<16x20xf32>
    %2 = tpu.matmul %0, %1, %cst {dimension_numbers = #tpu.dot_dimension_numbers<[1], [0], [0], [1], [0, 0, 1, 1], [], []>} : vector<16x16xbf16>, vector<16x20xbf16>, vector<16x20xf32> -> vector<16x20xf32>
    %c0_3 = arith.constant 0 : index
    %c0_4 = arith.constant 0 : index
    %3 = vector.load %arg3[%c0_3, %c0_4] : memref<1x20xf32, #tpu.memory_space<vmem>>, vector<1x20xf32>
    %4 = vector.broadcast %3 : vector<1x20xf32> to vector<16x20xf32>
    %5 = arith.addf %2, %4 : vector<16x20xf32>
    %cst_5 = arith.constant 0.000000e+00 : f32
    %6 = vector.broadcast %cst_5 : f32 to vector<16x20xf32>
    %7 = arith.maximumf %5, %6 : vector<16x20xf32>
    %8 = arith.truncf %7 : vector<16x20xf32> to vector<16x20xbf16>
    %c0_6 = arith.constant 0 : index
    %c0_7 = arith.constant 0 : index
    %9 = vector.load %arg4[%c0_6, %c0_7] : memref<20x10xbf16, #tpu.memory_space<vmem>>, vector<20x10xbf16>
    %cst_8 = arith.constant dense<0.000000e+00> : vector<16x10xf32>
    %10 = tpu.matmul %8, %9, %cst_8 {dimension_numbers = #tpu.dot_dimension_numbers<[1], [0], [0], [1], [0, 0, 1, 1], [], []>} : vector<16x20xbf16>, vector<20x10xbf16>, vector<16x10xf32> -> vector<16x10xf32>
    %c0_9 = arith.constant 0 : index
    %c0_10 = arith.constant 0 : index
    %11 = vector.load %arg5[%c0_9, %c0_10] : memref<1x10xf32, #tpu.memory_space<vmem>>, vector<1x10xf32>
    %12 = vector.broadcast %11 : vector<1x10xf32> to vector<16x10xf32>
    %13 = arith.addf %10, %12 : vector<16x10xf32>
    %cst_11 = arith.constant 0.000000e+00 : f32
    %14 = vector.broadcast %cst_11 : f32 to vector<16x10xf32>
    %15 = arith.maximumf %13, %14 : vector<16x10xf32>
    %16 = arith.truncf %15 : vector<16x10xf32> to vector<16x10xbf16>
    %c0_12 = arith.constant 0 : index
    %c0_13 = arith.constant 0 : index
    %17 = vector.load %arg6[%c0_12, %c0_13] : memref<10x5xbf16, #tpu.memory_space<vmem>>, vector<10x5xbf16>
    %cst_14 = arith.constant dense<0.000000e+00> : vector<16x5xf32>
    %18 = tpu.matmul %16, %17, %cst_14 {dimension_numbers = #tpu.dot_dimension_numbers<[1], [0], [0], [1], [0, 0, 1, 1], [], []>} : vector<16x10xbf16>, vector<10x5xbf16>, vector<16x5xf32> -> vector<16x5xf32>
    %c0_15 = arith.constant 0 : index
    %c0_16 = arith.constant 0 : index
    %19 = vector.load %arg7[%c0_15, %c0_16] : memref<1x5xf32, #tpu.memory_space<vmem>>, vector<1x5xf32>
    %20 = vector.broadcast %19 : vector<1x5xf32> to vector<16x5xf32>
    %21 = arith.addf %18, %20 : vector<16x5xf32>
    %cst_17 = arith.constant 0.000000e+00 : f32
    %22 = vector.broadcast %cst_17 : f32 to vector<16x5xf32>
    %23 = arith.maximumf %21, %22 : vector<16x5xf32>
    %24 = arith.truncf %23 : vector<16x5xf32> to vector<16x5xbf16>
    %c0_18 = arith.constant 0 : index
    %c0_19 = arith.constant 0 : index
    %25 = vector.load %arg8[%c0_18, %c0_19] : memref<5x8xbf16, #tpu.memory_space<vmem>>, vector<5x8xbf16>
    %cst_20 = arith.constant dense<0.000000e+00> : vector<16x8xf32>
    %26 = tpu.matmul %24, %25, %cst_20 {dimension_numbers = #tpu.dot_dimension_numbers<[1], [0], [0], [1], [0, 0, 1, 1], [], []>} : vector<16x5xbf16>, vector<5x8xbf16>, vector<16x8xf32> -> vector<16x8xf32>
    %c0_21 = arith.constant 0 : index
    %c0_22 = arith.constant 0 : index
    %27 = vector.load %arg9[%c0_21, %c0_22] : memref<1x8xf32, #tpu.memory_space<vmem>>, vector<1x8xf32>
    %28 = vector.broadcast %27 : vector<1x8xf32> to vector<16x8xf32>
    %29 = arith.addf %26, %28 : vector<16x8xf32>
    %cst_23 = arith.constant dense<0xFF800000> : vector<16xf32>
    %30 = vector.multi_reduction <maximumf>, %29, %cst_23 [1] : vector<16x8xf32> to vector<16xf32>
    %31 = vector.shape_cast %30 : vector<16xf32> to vector<16x1xf32>
    %32 = vector.broadcast %31 : vector<16x1xf32> to vector<16x8xf32>
    %33 = arith.subf %29, %32 : vector<16x8xf32>
    %34 = math.exp %33 : vector<16x8xf32>
    %cst_24 = arith.constant dense<0.000000e+00> : vector<16xf32>
    %35 = vector.multi_reduction <add>, %34, %cst_24 [1] : vector<16x8xf32> to vector<16xf32>
    %36 = vector.shape_cast %35 : vector<16xf32> to vector<16x1xf32>
    %37 = vector.broadcast %36 : vector<16x1xf32> to vector<16x8xf32>
    %38 = arith.divf %34, %37 : vector<16x8xf32>
    %c0_25 = arith.constant 0 : index
    %c0_26 = arith.constant 0 : index
    %39 = vector.load %arg10[%c0_25, %c0_26] : memref<16x8xf32, #tpu.memory_space<vmem>>, vector<16x8xf32>
    tpu.vector_store %arg10[%c0_25, %c0_26], %38 {strides = array<i32>} : memref<16x8xf32, #tpu.memory_space<vmem>>, vector<16x8xf32>,
    return
  }
  func.func @transform_0(%arg0: i32) -> (i32, i32) {
    %c0_i32 = arith.constant 0 : i32
    %c0_i32_0 = arith.constant 0 : i32
    return %arg0, %c0_i32 : i32, i32
  }
  func.func @transform_1(%arg0: i32) -> (i32, i32) {
    %c0_i32 = arith.constant 0 : i32
    %c0_i32_0 = arith.constant 0 : i32
    %c0_i32_1 = arith.constant 0 : i32
    return %c0_i32, %c0_i32_0 : i32, i32
  }
  func.func @transform_2(%arg0: i32) -> (i32, i32) {
    %c0_i32 = arith.constant 0 : i32
    %c0_i32_0 = arith.constant 0 : i32
    %c0_i32_1 = arith.constant 0 : i32
    return %c0_i32, %c0_i32_0 : i32, i32
  }
  func.func @transform_3(%arg0: i32) -> (i32, i32) {
    %c0_i32 = arith.constant 0 : i32
    %c0_i32_0 = arith.constant 0 : i32
    %c0_i32_1 = arith.constant 0 : i32
    return %c0_i32, %c0_i32_0 : i32, i32
  }
  func.func @transform_4(%arg0: i32) -> (i32, i32) {
    %c0_i32 = arith.constant 0 : i32
    %c0_i32_0 = arith.constant 0 : i32
    %c0_i32_1 = arith.constant 0 : i32
    return %c0_i32, %c0_i32_0 : i32, i32
  }
  func.func @transform_5(%arg0: i32) -> (i32, i32) {
    %c0_i32 = arith.constant 0 : i32
    %c0_i32_0 = arith.constant 0 : i32
    %c0_i32_1 = arith.constant 0 : i32
    return %c0_i32, %c0_i32_0 : i32, i32
  }
  func.func @transform_6(%arg0: i32) -> (i32, i32) {
    %c0_i32 = arith.constant 0 : i32
    %c0_i32_0 = arith.constant 0 : i32
    %c0_i32_1 = arith.constant 0 : i32
    return %c0_i32, %c0_i32_0 : i32, i32
  }
  func.func @transform_7(%arg0: i32) -> (i32, i32) {
    %c0_i32 = arith.constant 0 : i32
    %c0_i32_0 = arith.constant 0 : i32
    %c0_i32_1 = arith.constant 0 : i32
    return %c0_i32, %c0_i32_0 : i32, i32
  }
  func.func @transform_8(%arg0: i32) -> (i32, i32) {
    %c0_i32 = arith.constant 0 : i32
    %c0_i32_0 = arith.constant 0 : i32
    %c0_i32_1 = arith.constant 0 : i32
    return %c0_i32, %c0_i32_0 : i32, i32
  }
  func.func @transform_9(%arg0: i32) -> (i32, i32) {
    %c0_i32 = arith.constant 0 : i32
    %c0_i32_0 = arith.constant 0 : i32
    return %arg0, %c0_i32 : i32, i32
  }
}

</mosaic_0001>

<llo_original>
// kernel: tpu_custom_call.1
$region0: #{tpu_custom_call.1}
  #allocation0 [shape = 'u32[]', space=smem, size = 0x4, offset = 0x4, fixed_abs, tag = 'smem constant byte address 0x4 - core index']
  #allocation1 [shape = 'u32[72,128]{1,0:T(1,128)}', space=vmem, size = 0x9000, scoped, tag = 'internal scratch']
  %s0 = inlined_call_operand.vmem [shape: bf16[64,16], index: 0, kind: input, shape index: {}]
  %s1 = inlined_call_operand.vmem [shape: bf16[16,20], index: 1, kind: input, shape index: {}]
  %s2 = inlined_call_operand.vmem [shape: f32[1,20], index: 2, kind: input, shape index: {}]
  %s3 = inlined_call_operand.vmem [shape: bf16[20,10], index: 3, kind: input, shape index: {}]
  %s4 = inlined_call_operand.vmem [shape: f32[1,10], index: 4, kind: input, shape index: {}]
  %s5 = inlined_call_operand.vmem [shape: bf16[10,5], index: 5, kind: input, shape index: {}]
  %s6 = inlined_call_operand.vmem [shape: f32[1,5], index: 6, kind: input, shape index: {}]
  %s7 = inlined_call_operand.vmem [shape: bf16[5,8], index: 7, kind: input, shape index: {}]
  %s8 = inlined_call_operand.vmem [shape: f32[1,8], index: 8, kind: input, shape index: {}]
  %s9 = inlined_call_operand.vmem [shape: f32[64,8], index: 9, kind: output, shape index: {}]
  %s10 = sld [smem:[#allocation0]]
  $region69: #{tpu_custom_call.1} parent=0
    _
  %s12 = ssub.s32 1, %s10
  %s13 = scalar_select 0, %s12, %s10
  loop: start=0, step=1, limit=6
  $region2: #{tpu_custom_call.1} parent=0 // loop_pre_header
    _
  $region3: #{tpu_custom_call.1} parent=0 // loop_header
    %s15 = sphi 0, %s19
    %p16 = scmp.ge.s32.totalorder %s15, 6
    %s25 = sphi 0, %s27
    %s28 = sphi 0, %s25
    %s29 = sphi 0, %s28
    %s45 = sphi 0, %s29
    %s49 = sphi 0, %s49
    %s51 = sphi 0, %s49
    %s52 = sphi 0, %s51
    %s66 = sphi 0, %s52
    %s70 = sphi 0, %s70
    %s72 = sphi 0, %s70
    %s73 = sphi 0, %s72
    %s87 = sphi 0, %s73
    %s91 = sphi 0, %s91
    %s93 = sphi 0, %s91
    %s94 = sphi 0, %s93
    %s108 = sphi 0, %s94
    %s112 = sphi 0, %s112
    %s114 = sphi 0, %s112
    %s115 = sphi 0, %s114
    %s129 = sphi 0, %s115
    %s133 = sphi 0, %s133
    %s135 = sphi 0, %s133
    %s136 = sphi 0, %s135
    %s150 = sphi 0, %s136
    %s154 = sphi 0, %s154
    %s156 = sphi 0, %s154
    %s157 = sphi 0, %s156
    %s171 = sphi 0, %s157
    %s175 = sphi 0, %s175
    %s177 = sphi 0, %s175
    %s178 = sphi 0, %s177
    %s192 = sphi 0, %s178
    %s196 = sphi 0, %s196
    %s198 = sphi 0, %s196
    %s199 = sphi 0, %s198
    %s213 = sphi 0, %s199
    %s219 = sphi 0, %s221
    %s222 = sphi 0, %s219
    %s223 = sphi 0, %s222
    %s239 = sphi 0, %s223
  $region4: #{tpu_custom_call.1} parent=0 // loop_header_branch
    %18 = sbr.rel (%p16) target = $region8
  $region5: #{tpu_custom_call.1} parent=0 // loop_body
    %s20 = ssub.s32 %s15, 1
    %s21 = ssub.s32 %s15, 2
    %s22 = sadd.s32 %s15, 1
    %s23 = ssub.s32 %s15, %s22
    %p24 = scmp.eq.s32.totalorder %s23, 0
    %s26 = sadd.s32 %s25, 1
    %s27 = scalar_select %p24, %s25, %s26
    %p30 = pneg %p24
    %p31 = scmp.eq.s32.totalorder %s15, 3
    %p32 = por %p30, %p31
    %p33 = scmp.ne.s32.totalorder %s25, %s28
    %p34 = scmp.eq.s32.totalorder %s15, 0
    %p35 = por %p33, %p34
    %p36 = scmp.ne.s32.totalorder %s25, %s28
    %p37 = scmp.eq.s32.totalorder %s20, 3
    %p38 = por %p36, %p37
    %p39 = scmp.ne.s32.totalorder %s28, %s29
    %p40 = scmp.eq.s32.totalorder %s20, 0
    %p41 = por %p39, %p40
    %p42 = scmp.ne.s32.totalorder %s28, %s29
    %p43 = scmp.eq.s32.totalorder %s21, 3
    %p44 = por %p42, %p43
    %p46 = scmp.ne.s32.totalorder %s29, %s45
    %p47 = scmp.eq.s32.totalorder %s21, 0
    %p48 = por %p46, %p47
    %s50 = sadd.s32 %s49, 1
    %p53 = scmp.eq.s32.totalorder %s15, 3
    %p54 = scmp.ne.s32.totalorder %s49, %s51
    %p55 = scmp.eq.s32.totalorder %s15, 0
    %p56 = por %p54, %p55
    %p57 = scmp.ne.s32.totalorder %s49, %s51
    %p58 = scmp.eq.s32.totalorder %s20, 3
    %p59 = por %p57, %p58
    %p60 = scmp.ne.s32.totalorder %s51, %s52
    %p61 = scmp.eq.s32.totalorder %s20, 0
    %p62 = por %p60, %p61
    %p63 = scmp.ne.s32.totalorder %s51, %s52
    %p64 = scmp.eq.s32.totalorder %s21, 3
    %p65 = por %p63, %p64
    %p67 = scmp.ne.s32.totalorder %s52, %s66
    %p68 = scmp.eq.s32.totalorder %s21, 0
    %p69 = por %p67, %p68
    %s71 = sadd.s32 %s70, 1
    %p74 = scmp.eq.s32.totalorder %s15, 3
    %p75 = scmp.ne.s32.totalorder %s70, %s72
    %p76 = scmp.eq.s32.totalorder %s15, 0
    %p77 = por %p75, %p76
    %p78 = scmp.ne.s32.totalorder %s70, %s72
    %p79 = scmp.eq.s32.totalorder %s20, 3
    %p80 = por %p78, %p79
    %p81 = scmp.ne.s32.totalorder %s72, %s73
    %p82 = scmp.eq.s32.totalorder %s20, 0
    %p83 = por %p81, %p82
    %p84 = scmp.ne.s32.totalorder %s72, %s73
    %p85 = scmp.eq.s32.totalorder %s21, 3
    %p86 = por %p84, %p85
    %p88 = scmp.ne.s32.totalorder %s73, %s87
    %p89 = scmp.eq.s32.totalorder %s21, 0
    %p90 = por %p88, %p89
    %s92 = sadd.s32 %s91, 1
    %p95 = scmp.eq.s32.totalorder %s15, 3
    %p96 = scmp.ne.s32.totalorder %s91, %s93
    %p97 = scmp.eq.s32.totalorder %s15, 0
    %p98 = por %p96, %p97
    %p99 = scmp.ne.s32.totalorder %s91, %s93
    %p100 = scmp.eq.s32.totalorder %s20, 3
    %p101 = por %p99, %p100
    %p102 = scmp.ne.s32.totalorder %s93, %s94
    %p103 = scmp.eq.s32.totalorder %s20, 0
    %p104 = por %p102, %p103
    %p105 = scmp.ne.s32.totalorder %s93, %s94
    %p106 = scmp.eq.s32.totalorder %s21, 3
    %p107 = por %p105, %p106
    %p109 = scmp.ne.s32.totalorder %s94, %s108
    %p110 = scmp.eq.s32.totalorder %s21, 0
    %p111 = por %p109, %p110
    %s113 = sadd.s32 %s112, 1
    %p116 = scmp.eq.s32.totalorder %s15, 3
    %p117 = scmp.ne.s32.totalorder %s112, %s114
    %p118 = scmp.eq.s32.totalorder %s15, 0
    %p119 = por %p117, %p118
    %p120 = scmp.ne.s32.totalorder %s112, %s114
    %p121 = scmp.eq.s32.totalorder %s20, 3
    %p122 = por %p120, %p121
    %p123 = scmp.ne.s32.totalorder %s114, %s115
    %p124 = scmp.eq.s32.totalorder %s20, 0
    %p125 = por %p123, %p124
    %p126 = scmp.ne.s32.totalorder %s114, %s115
    %p127 = scmp.eq.s32.totalorder %s21, 3
    %p128 = por %p126, %p127
    %p130 = scmp.ne.s32.totalorder %s115, %s129
    %p131 = scmp.eq.s32.totalorder %s21, 0
    %p132 = por %p130, %p131
    %s134 = sadd.s32 %s133, 1
    %p137 = scmp.eq.s32.totalorder %s15, 3
    %p138 = scmp.ne.s32.totalorder %s133, %s135
    %p139 = scmp.eq.s32.totalorder %s15, 0
    %p140 = por %p138, %p139
    %p141 = scmp.ne.s32.totalorder %s133, %s135
    %p142 = scmp.eq.s32.totalorder %s20, 3
    %p143 = por %p141, %p142
    %p144 = scmp.ne.s32.totalorder %s135, %s136
    %p145 = scmp.eq.s32.totalorder %s20, 0
    %p146 = por %p144, %p145
    %p147 = scmp.ne.s32.totalorder %s135, %s136
    %p148 = scmp.eq.s32.totalorder %s21, 3
    %p149 = por %p147, %p148
    %p151 = scmp.ne.s32.totalorder %s136, %s150
    %p152 = scmp.eq.s32.totalorder %s21, 0
    %p153 = por %p151, %p152
    %s155 = sadd.s32 %s154, 1
    %p158 = scmp.eq.s32.totalorder %s15, 3
    %p159 = scmp.ne.s32.totalorder %s154, %s156
    %p160 = scmp.eq.s32.totalorder %s15, 0
    %p161 = por %p159, %p160
    %p162 = scmp.ne.s32.totalorder %s154, %s156
    %p163 = scmp.eq.s32.totalorder %s20, 3
    %p164 = por %p162, %p163
    %p165 = scmp.ne.s32.totalorder %s156, %s157
    %p166 = scmp.eq.s32.totalorder %s20, 0
    %p167 = por %p165, %p166
    %p168 = scmp.ne.s32.totalorder %s156, %s157
    %p169 = scmp.eq.s32.totalorder %s21, 3
    %p170 = por %p168, %p169
    %p172 = scmp.ne.s32.totalorder %s157, %s171
    %p173 = scmp.eq.s32.totalorder %s21, 0
    %p174 = por %p172, %p173
    %s176 = sadd.s32 %s175, 1
    %p179 = scmp.eq.s32.totalorder %s15, 3
    %p180 = scmp.ne.s32.totalorder %s175, %s177
    %p181 = scmp.eq.s32.totalorder %s15, 0
    %p182 = por %p180, %p181
    %p183 = scmp.ne.s32.totalorder %s175, %s177
    %p184 = scmp.eq.s32.totalorder %s20, 3
    %p185 = por %p183, %p184
    %p186 = scmp.ne.s32.totalorder %s177, %s178
    %p187 = scmp.eq.s32.totalorder %s20, 0
    %p188 = por %p186, %p187
    %p189 = scmp.ne.s32.totalorder %s177, %s178
    %p190 = scmp.eq.s32.totalorder %s21, 3
    %p191 = por %p189, %p190
    %p193 = scmp.ne.s32.totalorder %s178, %s192
    %p194 = scmp.eq.s32.totalorder %s21, 0
    %p195 = por %p193, %p194
    %s197 = sadd.s32 %s196, 1
    %p200 = scmp.eq.s32.totalorder %s15, 3
    %p201 = scmp.ne.s32.totalorder %s196, %s198
    %p202 = scmp.eq.s32.totalorder %s15, 0
    %p203 = por %p201, %p202
    %p204 = scmp.ne.s32.totalorder %s196, %s198
    %p205 = scmp.eq.s32.totalorder %s20, 3
    %p206 = por %p204, %p205
    %p207 = scmp.ne.s32.totalorder %s198, %s199
    %p208 = scmp.eq.s32.totalorder %s20, 0
    %p209 = por %p207, %p208
    %p210 = scmp.ne.s32.totalorder %s198, %s199
    %p211 = scmp.eq.s32.totalorder %s21, 3
    %p212 = por %p210, %p211
    %p214 = scmp.ne.s32.totalorder %s199, %s213
    %p215 = scmp.eq.s32.totalorder %s21, 0
    %p216 = por %p214, %p215
    %s217 = ssub.s32 %s15, %s22
    %p218 = scmp.eq.s32.totalorder %s217, 0
    %s220 = sadd.s32 %s219, 1
    %s221 = scalar_select %p218, %s219, %s220
    %p224 = pneg %p218
    %p225 = scmp.eq.s32.totalorder %s15, 3
    %p226 = por %p224, %p225
    %p227 = scmp.ne.s32.totalorder %s219, %s222
    %p228 = scmp.eq.s32.totalorder %s15, 0
    %p229 = por %p227, %p228
    %p230 = scmp.ne.s32.totalorder %s219, %s222
    %p231 = scmp.eq.s32.totalorder %s20, 3
    %p232 = por %p230, %p231
    %p233 = scmp.ne.s32.totalorder %s222, %s223
    %p234 = scmp.eq.s32.totalorder %s20, 0
    %p235 = por %p233, %p234
    %p236 = scmp.ne.s32.totalorder %s222, %s223
    %p237 = scmp.eq.s32.totalorder %s21, 3
    %p238 = por %p236, %p237
    %p240 = scmp.ne.s32.totalorder %s223, %s239
    %p241 = scmp.eq.s32.totalorder %s21, 0
    %p242 = por %p240, %p241
    %p243 = scmp.le.s32.totalorder 1, %s15
    %p244 = scmp.lt.s32.totalorder %s15, 5
    %p245 = pnand %p243, %p244
    %p246 = pneg %p245
    // Predicated region
    $region9: #{tpu_custom_call.1} parent=5 // pred_check
      _
    $region10: #{tpu_custom_call.1} parent=5 // pred_check_branch
      %248 = sbr.rel (%p245) target = $region12
    $region11: #{tpu_custom_call.1} parent=5 // pred_region
      %s249 = ssub.s32 %s15, 1
      // Predicated region
      $region13: #{tpu_custom_call.1} parent=11 // pred_check
        %p250 = pneg %p62
      $region14: #{tpu_custom_call.1} parent=11 // pred_check_branch
        %252 = sbr.rel (%p250) target = $region16
      $region15: #{tpu_custom_call.1} parent=11 // pred_region
        _
      $region16: #{tpu_custom_call.1} parent=11 // pred_fallthru
        _
      // Predicated region
      $region17: #{tpu_custom_call.1} parent=11 // pred_check
        %p253 = pneg %p83
      $region18: #{tpu_custom_call.1} parent=11 // pred_check_branch
        %255 = sbr.rel (%p253) target = $region20
      $region19: #{tpu_custom_call.1} parent=11 // pred_region
        _
      $region20: #{tpu_custom_call.1} parent=11 // pred_fallthru
        _
      // Predicated region
      $region21: #{tpu_custom_call.1} parent=11 // pred_check
        %p256 = pneg %p104
      $region22: #{tpu_custom_call.1} parent=11 // pred_check_branch
        %258 = sbr.rel (%p256) target = $region24
      $region23: #{tpu_custom_call.1} parent=11 // pred_region
        _
      $region24: #{tpu_custom_call.1} parent=11 // pred_fallthru
        _
      // Predicated region
      $region25: #{tpu_custom_call.1} parent=11 // pred_check
        %p259 = pneg %p125
      $region26: #{tpu_custom_call.1} parent=11 // pred_check_branch
        %261 = sbr.rel (%p259) target = $region28
      $region27: #{tpu_custom_call.1} parent=11 // pred_region
        _
      $region28: #{tpu_custom_call.1} parent=11 // pred_fallthru
        _
      // Predicated region
      $region29: #{tpu_custom_call.1} parent=11 // pred_check
        %p262 = pneg %p146
      $region30: #{tpu_custom_call.1} parent=11 // pred_check_branch
        %264 = sbr.rel (%p262) target = $region32
      $region31: #{tpu_custom_call.1} parent=11 // pred_region
        _
      $region32: #{tpu_custom_call.1} parent=11 // pred_fallthru
        _
      // Predicated region
      $region33: #{tpu_custom_call.1} parent=11 // pred_check
        %p265 = pneg %p167
      $region34: #{tpu_custom_call.1} parent=11 // pred_check_branch
        %267 = sbr.rel (%p265) target = $region36
      $region35: #{tpu_custom_call.1} parent=11 // pred_region
        _
      $region36: #{tpu_custom_call.1} parent=11 // pred_fallthru
        _
      // Predicated region
      $region37: #{tpu_custom_call.1} parent=11 // pred_check
        %p268 = pneg %p188
      $region38: #{tpu_custom_call.1} parent=11 // pred_check_branch
        %270 = sbr.rel (%p268) target = $region40
      $region39: #{tpu_custom_call.1} parent=11 // pred_region
        _
      $region40: #{tpu_custom_call.1} parent=11 // pred_fallthru
        _
      // Predicated region
      $region41: #{tpu_custom_call.1} parent=11 // pred_check
        %p271 = pneg %p209
      $region42: #{tpu_custom_call.1} parent=11 // pred_check_branch
        %273 = sbr.rel (%p271) target = $region44
      $region43: #{tpu_custom_call.1} parent=11 // pred_region
        _
      $region44: #{tpu_custom_call.1} parent=11 // pred_fallthru
        _
    $region12: #{tpu_custom_call.1} parent=5 // pred_fallthru
      _
    %p274 = scmp.lt.s32.totalorder %s15, 4
    // Predicated region
    $region45: #{tpu_custom_call.1} parent=5 // pred_check
      %p275 = pneg %p274
    $region46: #{tpu_custom_call.1} parent=5 // pred_check_branch
      %277 = sbr.rel (%p275) target = $region48
    $region47: #{tpu_custom_call.1} parent=5 // pred_region
      // Predicated region
      $region49: #{tpu_custom_call.1} parent=47 // pred_check
        %p278 = pneg %p35
      $region50: #{tpu_custom_call.1} parent=47 // pred_check_branch
        %280 = sbr.rel (%p278) target = $region52
      $region51: #{tpu_custom_call.1} parent=47 // pred_region
        %s281 = smul.u32 2, %s15
        %p282 = scmp.lt.s32.totalorder %s281, 7
        %s283 = scalar_select %p282, %s281, 7
        %s284 = smul.addr %s283, 4
        %s285 = scalar_lea.vmem %s0, %s284
        %s286 = smul.u32 2, %s15
      $region52: #{tpu_custom_call.1} parent=47 // pred_fallthru
        _
    $region48: #{tpu_custom_call.1} parent=5 // pred_fallthru
      _
    %p287 = scmp.le.s32.totalorder 1, %s15
    %p288 = scmp.lt.s32.totalorder %s15, 5
    %p289 = pnand %p287, %p288
    %p290 = pneg %p289
    // Predicated region
    $region53: #{tpu_custom_call.1} parent=5 // pred_check
      _
    $region54: #{tpu_custom_call.1} parent=5 // pred_check_branch
      %292 = sbr.rel (%p289) target = $region56
    $region55: #{tpu_custom_call.1} parent=5 // pred_region
      %s293 = ssub.s32 %s15, 1
      %s294 = smul.u32 2, %s20
      %p295 = scmp.lt.s32.totalorder %s294, 7
      %s296 = scalar_select %p295, %s294, 7
      %s297 = smul.addr %s296, 4
      %s298 = scalar_lea.vmem %s0, %s297
      %p299 = pneg %p41
      %p300 = pneg %p38
      %p301 = pneg %p62
      %p302 = pneg %p59
      %p303 = pneg %p83
      %p304 = pneg %p80
      %p305 = pneg %p104
      %p306 = pneg %p101
      %p307 = pneg %p125
      %p308 = pneg %p122
      %p309 = pneg %p146
      %p310 = pneg %p143
      %p311 = pneg %p167
      %p312 = pneg %p164
      %p313 = pneg %p188
      %p314 = pneg %p185
      %p315 = pneg %p209
      %p316 = pneg %p206
      %p317 = pneg %p235
      %p318 = pneg %p232
      %s319 = smul.u32 2, %s20
      %p320 = scmp.lt.s32.totalorder %s319, 7
      %s321 = scalar_select %p320, %s319, 7
      %s322 = smul.addr %s321, 8
      %s323 = scalar_lea.vmem %s9, %s322
      %s324 = smul.u32 2, %s20
      %p325 = scmp.lt.s32.totalorder %s324, 7
      %s326 = scalar_select %p325, %s324, 7
      %s327 = smul.addr %s326, 4
      %s328 = scalar_lea.vmem %s0, %s327
      %s329 = smul.u32 2, %s20
      %s330 = smul.u32 2, %s20
      %p331 = scmp.lt.s32.totalorder %s330, 7
      %s332 = scalar_select %p331, %s330, 7
      %s333 = smul.addr %s332, 8
      %s334 = scalar_lea.vmem %s9, %s333
      %s335 = smul.u32 2, %s20
      %v337 = vld [vmem:[%s328] sm:$0xf]
      %v338 = vld [vmem:[%s328 + $0x4] sm:$0xf]
      %v339 = vld [vmem:[%s1] sm:$0xf]
      %v340 = vld [vmem:[%s1 + $0x4] sm:$0xf]
      %v341 = vld [vmem:[%s2] sm:$0x1]
      %v343 = vperm.slane %v341, 0
      %v347 = vunpack.c.l.b16 %v337
      %v348 = vunpack.c.l.b16 %v338
      %v349 = vpack.c.b16 %v348, %v347
      %v352 = vunpack.c.l.b16 %v339
      %v353 = vunpack.c.l.b16 %v340
      %v354 = vpack.c.b16 %v353, %v352
      %vm356 = vcmask 130048
      %v358 = vsel %vm356, %v349, 0
      %360 = vmatpush.bf16.msra.mxu0 0
      %361 = vmatpush.bf16.msra.mxu0 0
      %362 = vmatpush.bf16.msra.mxu0 0
      %363 = vmatpush.bf16.msra.mxu0 0
      %364 = vmatpush.bf16.msra.mxu0 0
      %365 = vmatpush.bf16.msra.mxu0 0
      %366 = vmatpush.bf16.msra.mxu0 0
      %367 = vmatpush.bf16.msra.mxu0 %v354
      %368 = vmatmul.bf16.gmra.mxu0 %v358
      %v369 = vpop.f32.mrf.mxu0
      %v370 = vadd.f32 %v343, %v369
      %v371 = vpop.f32.mrf.mxu0
      %v372 = vadd.f32 %v343, %v371
      %373 = vdwg.mxu0
      %v374 = vmax.f32 %v370, 0.0
      %v375 = vmax.f32 %v372, 0.0
      %v376 = vpack.c.bf16 %v375, %v374
      %v377 = vld [vmem:[%s3] sm:$0xf]
      %v378 = vld [vmem:[%s3 + $0x4] sm:$0xf]
      %v379 = vld [vmem:[%s3 + $0x8] sm:$0x3]
      %v380 = vld [vmem:[%s4] sm:$0x1]
      %v382 = vperm.slane %v380, 0
      %v387 = vunpack.c.l.b16 %v377
      %v388 = vunpack.c.l.b16 %v378
      %v389 = vunpack.c.l.b16 %v379
      %v390 = vpack.c.b16 %v388, %v387
      %v391 = vpack.c.b16 %v389, %v389
      %vm393 = vcmask 162816
      %v395 = vsel %vm393, %v376, 0
      %vm397 = vcmask 1041408
      %v399 = vsel %vm397, %v391, 0
      %401 = vmatpush.bf16.msra.mxu0 0
      %402 = vmatpush.bf16.msra.mxu0 0
      %403 = vmatpush.bf16.msra.mxu0 0
      %404 = vmatpush.bf16.msra.mxu0 0
      %405 = vmatpush.bf16.msra.mxu0 0
      %406 = vmatpush.bf16.msra.mxu0 0
      %407 = vmatpush.bf16.msra.mxu0 %v399
      %408 = vmatpush.bf16.msra.mxu0 %v390
      %409 = vmatmul.bf16.gmra.mxu0 %v395
      %v410 = vpop.f32.mrf.mxu0
      %v411 = vadd.f32 %v382, %v410
      %v412 = vpop.f32.mrf.mxu0
      %v413 = vadd.f32 %v382, %v412
      %414 = vdwg.mxu0
      %v415 = vmax.f32 %v411, 0.0
      %v416 = vmax.f32 %v413, 0.0
      %v417 = vpack.c.bf16 %v416, %v415
      %v418 = vld [vmem:[%s5] sm:$0xf]
      %v419 = vld [vmem:[%s5 + $0x4] sm:$0x1]
      %v420 = vld [vmem:[%s6] sm:$0x1]
      %v422 = vperm.slane %v420, 0
      %v426 = vunpack.c.l.b16 %v418
      %v427 = vunpack.c.l.b16 %v419
      %v428 = vpack.c.b16 %v427, %v426
      %vm429 = vcmask 80896
      %v431 = vsel %vm429, %v417, 0
      %vm433 = vcmask 1044480
      %v435 = vsel %vm433, %v428, 0
      %437 = vmatpush.bf16.msra.mxu0 0
      %438 = vmatpush.bf16.msra.mxu0 0
      %439 = vmatpush.bf16.msra.mxu0 0
      %440 = vmatpush.bf16.msra.mxu0 0
      %441 = vmatpush.bf16.msra.mxu0 0
      %442 = vmatpush.bf16.msra.mxu0 0
      %443 = vmatpush.bf16.msra.mxu0 0
      %444 = vmatpush.bf16.msra.mxu0 %v435
      %445 = vmatmul.bf16.gmra.mxu0 %v431
      %v446 = vpop.f32.mrf.mxu0
      %v447 = vadd.f32 %v422, %v446
      %v448 = vpop.f32.mrf.mxu0
      %v449 = vadd.f32 %v422, %v448
      %450 = vdwg.mxu0
      %v451 = vmax.f32 %v447, 0.0
      %v452 = vmax.f32 %v449, 0.0
      %v453 = vpack.c.bf16 %v452, %v451
      %v454 = vld [vmem:[%s7] sm:$0x7]
      %v455 = vld [vmem:[%s8] sm:$0x1]
      %v457 = vperm.slane %v455, 0
      %vm459 = vcmask 39936
      %v461 = vsel %vm459, %v453, 0
      %vm463 = vcmask 1042432
      %v464 = vsel %vm397, 4294967295, 65535
      %v465 = vsel %vm463, %v464, 0
      %v467 = vand.u32 %v454, %v465
      %469 = vmatpush.bf16.msra.mxu0 0
      %470 = vmatpush.bf16.msra.mxu0 0
      %471 = vmatpush.bf16.msra.mxu0 0
      %472 = vmatpush.bf16.msra.mxu0 0
      %473 = vmatpush.bf16.msra.mxu0 0
      %474 = vmatpush.bf16.msra.mxu0 0
      %475 = vmatpush.bf16.msra.mxu0 0
      %476 = vmatpush.bf16.msra.mxu0 %v467
      %477 = vmatmul.bf16.gmra.mxu0 %v461
      %v478 = vpop.f32.mrf.mxu0
      %v479 = vadd.f32 %v457, %v478
      %v480 = vpop.f32.mrf.mxu0
      %v481 = vadd.f32 %v457, %v480
      %482 = vdwg.mxu0
      %vm483 = vcmask 64512
      %v484 = vsel %vm483, %v479, -inf
      %485 = vmax.xlane.f32.xlu0 %v484
      %v486 = vpop.xlane.xlu0 %485
      %v487 = vsel %vm483, %v481, -inf
      %488 = vmax.xlane.f32.xlu0 %v487
      %v489 = vpop.xlane.xlu0 %488
      %v490 = vsub.f32 %v479, %v486
      %v491 = vsub.f32 %v481, %v489
      %v492 = vmul.f32 %v490, 1.442695
      %v493 = vpow.pop %v492
      %v494 = vmul.f32 %v491, 1.442695
      %v495 = vpow.pop %v494
      %v496 = vsel %vm483, %v493, 0.0
      %497 = vadd.xlane.f32.xlu0 %v496
      %v498 = vpop.xlane.xlu0 %497
      %v499 = vsel %vm483, %v495, 0.0
      %500 = vadd.xlane.f32.xlu0 %v499
      %v501 = vpop.xlane.xlu0 %500
      %v502 = vrcp.pop %v498
      %v503 = vmul.f32 %v498, %v502
      %v504 = vsub.f32 1.0, %v503
      %v505 = vmul.f32 %v502, %v504
      %v506 = vadd.f32 %v502, %v505
      %vm507 = vweird.f32 %v498
      %vm508 = vweird.f32 %v502
      %vm509 = vmor %vm507, %vm508
      %v510 = vsel %vm509, %v502, %v506
      %v511 = vand.u32 2147483647, %v498
      %vm512 = vcmp.eq.f32.partialorder %v511, 8.507059e+37
      %v513 = vand.u32 %v498, 2147483648
      %v514 = vor.u32 1.1754944e-38, %v513
      %v515 = vsel %vm512, %v514, %v510
      %v516 = vmul.f32 %v493, %v515
      %v517 = vrcp.pop %v501
      %v518 = vmul.f32 %v501, %v517
      %v519 = vsub.f32 1.0, %v518
      %v520 = vmul.f32 %v517, %v519
      %v521 = vadd.f32 %v517, %v520
      %vm522 = vweird.f32 %v501
      %vm523 = vweird.f32 %v517
      %vm524 = vmor %vm522, %vm523
      %v525 = vsel %vm524, %v517, %v521
      %v526 = vand.u32 2147483647, %v501
      %vm527 = vcmp.eq.f32.partialorder %v526, 8.507059e+37
      %v528 = vand.u32 %v501, 2147483648
      %v529 = vor.u32 1.1754944e-38, %v528
      %v530 = vsel %vm527, %v529, %v525
      %v531 = vmul.f32 %v495, %v530
      %532 = vst.msk [vmem:[%s334] sm:$0xff] %vm483, %v516
      %533 = vst.msk [vmem:[%s334 + $0x8] sm:$0xff] %vm483, %v531
      %s534 = smul.u32 2, %s20
      %p535 = scmp.lt.s32.totalorder %s534, 7
      %s536 = scalar_select %p535, %s534, 7
      %s537 = smul.addr %s536, 8
      %s538 = scalar_lea.vmem %s9, %s537
      // Predicated region
      $region57: #{tpu_custom_call.1} parent=55 // pred_check
        %p539 = pneg %p232
      $region58: #{tpu_custom_call.1} parent=55 // pred_check_branch
        %541 = sbr.rel (%p539) target = $region60
      $region59: #{tpu_custom_call.1} parent=55 // pred_region
        %s542 = smul.u32 2, %s20
      $region60: #{tpu_custom_call.1} parent=55 // pred_fallthru
        _
    $region56: #{tpu_custom_call.1} parent=5 // pred_fallthru
      _
    %p543 = scmp.le.s32.totalorder 2, %s15
    // Predicated region
    $region61: #{tpu_custom_call.1} parent=5 // pred_check
      %p544 = pneg %p543
    $region62: #{tpu_custom_call.1} parent=5 // pred_check_branch
      %546 = sbr.rel (%p544) target = $region64
    $region63: #{tpu_custom_call.1} parent=5 // pred_region
      %s547 = ssub.s32 %s15, 2
      // Predicated region
      $region65: #{tpu_custom_call.1} parent=63 // pred_check
        %p548 = pneg %p238
      $region66: #{tpu_custom_call.1} parent=63 // pred_check_branch
        %550 = sbr.rel (%p548) target = $region68
      $region67: #{tpu_custom_call.1} parent=63 // pred_region
        %s551 = smul.u32 2, %s21
        %p552 = scmp.lt.s32.totalorder %s551, 7
        %s553 = scalar_select %p552, %s551, 7
        %s554 = smul.addr %s553, 8
        %s555 = scalar_lea.vmem %s9, %s554
      $region68: #{tpu_custom_call.1} parent=63 // pred_fallthru
        _
    $region64: #{tpu_custom_call.1} parent=5 // pred_fallthru
      _
  $region6: #{tpu_custom_call.1} parent=0 // loop_footer
    %s19 = sadd.s32 1, %s15
  $region7: #{tpu_custom_call.1} parent=0 // loop_footer_branch
    %14 = sbr.rel target = $region3
  $region8: #{tpu_custom_call.1} parent=0 // loop_exit
    _

</llo_original>
